<compile_context>
chip_gen: v7x
topology: tpu7x:2x2x1
jax: 0.10.0
libtpu: 0.0.40
codegen_flags: <defaults>
</compile_context>

<pallas_src>
import functools
import math

import jax
import jax.numpy as jnp
from jax.experimental import pallas as pl
from jax.experimental.pallas import tpu as pltpu

ALPHA = 1.0
GAMMA = 2  # specialized below: (1 - pt)**2 is computed as q * q

# Focal loss of a zero-padded element (x=0, t=0): bce=ln2, pt=0.5 -> 0.25*ln2.
_PAD_LOSS_PER_ELEM = 0.25 * math.log(2.0)


def _focal_loss_kernel(x_ref, t_ref, out_ref, acc_ref, *, binary_targets):
    j = pl.program_id(1)

    @pl.when(j == 0)
    def _init():
        acc_ref[...] = jnp.zeros_like(acc_ref)

    x = x_ref[...].astype(jnp.float32)
    t = t_ref[...].astype(jnp.float32)

    # Numerically stable BCE-with-logits (== F.binary_cross_entropy_with_logits):
    #   bce = max(x, 0) - x*t + log1p(exp(-|x|))
    e = jnp.exp(-jnp.abs(x))
    bce = jnp.maximum(x, 0.0) - x * t + jnp.log1p(e)

    if binary_targets:
        # pt = exp(-bce) without a second exp, using e = exp(-|x|):
        #   exp(x*t - max(x,0)) = 1 if sign(x) matches t else e   (t in {0,1})
        #   exp(-log1p(e))      = 1 / (1 + e)
        num = jnp.where(jnp.logical_xor(x >= 0.0, t > 0.5), e, 1.0)
        pt = num / (1.0 + e)
    else:
        pt = jnp.exp(-bce)

    q = 1.0 - pt
    f_loss = bce * (q * q)  # gamma == 2: explicit square, no float-exponent pow
    if ALPHA != 1.0:
        f_loss = ALPHA * f_loss

    # Partial row reduction into the small (8, C) accumulator: cross-vreg VPU
    # adds only.  No per-step cross-lane reduce, no full-tile acc load/store.
    rows, c = f_loss.shape
    acc_ref[...] += f_loss.reshape(rows // 8, 8, c).sum(axis=0)

    @pl.when(j == pl.num_programs(1) - 1)
    def _finalize():
        # Single cross-lane/sublane reduce per split; per-split partial sum.
        out_ref[0, 0] = jnp.sum(acc_ref[...])


def _tpu_generation():
    try:
        kind = jax.devices()[0].device_kind.lower()
    except Exception:
        return None
    for gen in ("v7", "v6", "v5"):
        if gen in kind:
            return gen
    return None


def focal_loss(logits, targets, *, num_splits=None, target_tile_bytes=None,
               binary_targets=True):
    """Pallas implementation of FocalLoss.forward.

    Args:
      logits:  list/tuple whose first element is an (N, C) array
               (matches `logits = logits[0]` in the PyTorch module).
      targets: (N, C) array of {0, 1} targets (any dtype; cast to f32 in-kernel).
               For best bandwidth, produce targets as bf16/int8 upstream so the
               narrowing fuses with their producer.
      binary_targets: if False, use the exact exp(-bce) path (soft targets).
    Returns:
      ([scalar_loss], None)
    """
    x = logits[0]
    t = targets
    n, c = x.shape
    assert t.shape == (n, c), (x.shape, t.shape)

    gen = _tpu_generation()
    if num_splits is None:
        # Only v7x has 2 TensorCores per chip; elsewhere a split is just a
        # serial loop that halves the max tile size.
        num_splits = 2 if gen == "v7" else 1
    if target_tile_bytes is None:
        target_tile_bytes = (2 << 20) if gen == "v5" else (4 << 20)

    x_item = jnp.dtype(x.dtype).itemsize
    t_item = jnp.dtype(t.dtype).itemsize

    # Sublane granularity: 8 for >=4-byte dtypes, 16 if any input is 16-bit.
    sub = 8 if min(x_item, t_item) >= 4 else 16

    # Largest tile_n within the per-input VMEM budget, but no larger than one
    # split's worth of rows (rounded up to the sublane multiple).
    row_bytes = c * max(x_item, t_item)
    cap = max(sub, (target_tile_bytes // row_bytes) // sub * sub)
    rows_per_split = -(-n // num_splits)
    need = -(-rows_per_split // sub) * sub
    tile_n = max(sub, min(cap, need))

    tiles_per_split = -(-n // (num_splits * tile_n))
    n_pad = num_splits * tiles_per_split * tile_n
    if n_pad != n:
        # Zero-pad; each padded element contributes exactly 0.25*ln(2), which
        # is subtracted in closed form below (no in-kernel mask needed).
        x = jnp.pad(x, ((0, n_pad - n), (0, 0)))
        t = jnp.pad(t, ((0, n_pad - n), (0, 0)))

    # VMEM budget: 2 inputs x 2 buffers x tile, headroom for f32 elementwise
    # temporaries, the (8, C) accumulator, plus slack.  Capped per generation.
    in_bytes = 2 * tile_n * c * (x_item + t_item)
    tmp_bytes = 3 * tile_n * c * 4
    vmem_limit = max(32 << 20, in_bytes + tmp_bytes + 8 * c * 4 + (4 << 20))
    vmem_limit = min(vmem_limit, (60 << 20) if gen == "v7" else (100 << 20))

    kernel = functools.partial(_focal_loss_kernel, binary_targets=binary_targets)

    partial_sums = pl.pallas_call(
        kernel,
        out_shape=jax.ShapeDtypeStruct((num_splits, 1), jnp.float32),
        grid_spec=pltpu.PrefetchScalarGridSpec(
            num_scalar_prefetch=0,
            grid=(num_splits, tiles_per_split),
            in_specs=[
                pl.BlockSpec((tile_n, c),
                             lambda i, j: (i * tiles_per_split + j, 0)),
                pl.BlockSpec((tile_n, c),
                             lambda i, j: (i * tiles_per_split + j, 0)),
            ],
            out_specs=pl.BlockSpec(
                (1, 1), lambda i, j: (i, 0),
                memory_space=pltpu.MemorySpace.SMEM),
            scratch_shapes=[pltpu.VMEM((8, c), jnp.float32)],
        ),
        compiler_params=pltpu.CompilerParams(
            # First axis parallel -> both TensorCores used on v7x; the second
            # (reduction) axis stays sequential per core.
            dimension_semantics=("parallel", "arbitrary"),
            vmem_limit_bytes=int(vmem_limit),
        ),
        cost_estimate=pl.CostEstimate(
            flops=12 * n_pad * c,
            transcendentals=(2 if binary_targets else 3) * n_pad * c,
            bytes_accessed=n_pad * c * (x_item + t_item) + num_splits * 4,
        ),
    )(x, t)

    total = jnp.sum(partial_sums)
    if n_pad != n:
        total = total - jnp.float32((n_pad - n) * c * _PAD_LOSS_PER_ELEM)
    # sum(1).mean() == total_sum / N.
    loss = total / jnp.float32(n)
    return ([loss], None)


def _focal_loss_ref(logits, targets):
    x = logits[0].astype(jnp.float32)
    t = targets.astype(jnp.float32)
    bce = jnp.maximum(x, 0.0) - x * t + jnp.log1p(jnp.exp(-jnp.abs(x)))
    pt = jnp.exp(-bce)
    fl = ALPHA * (1.0 - pt) ** GAMMA * bce
    return fl.sum(1).mean()


if __name__ == "__main__":
    key = jax.random.PRNGKey(0)
    k1, k2, k3, k4, k5, k6, k7, k8 = jax.random.split(key, 8)

    # Case 1: shapes aligned to the tiling (no pad-correction path).
    N1, C1 = 16, 128
    logits1 = jax.random.normal(k1, (N1, C1), dtype=jnp.float32) * 2.0
    targets1 = (jax.random.uniform(k2, (N1, C1)) > 0.5).astype(jnp.float32)
    loss1 = jax.block_until_ready(focal_loss([logits1], targets1)[0][0])
    ref1 = _focal_loss_ref([logits1], targets1)
    assert jnp.allclose(loss1, ref1, rtol=1e-4, atol=1e-5), (loss1, ref1)

    # Case 2: batch not divisible by the tile (exercises pad + closed-form fix).
    N2, C2 = 20, 128
    logits2 = jax.random.normal(k3, (N2, C2), dtype=jnp.float32) * 2.0
    targets2 = (jax.random.uniform(k4, (N2, C2)) > 0.5).astype(jnp.float32)
    loss2 = jax.block_until_ready(focal_loss([logits2], targets2)[0][0])
    ref2 = _focal_loss_ref([logits2], targets2)
    assert jnp.allclose(loss2, ref2, rtol=1e-4, atol=1e-5), (loss2, ref2)

    # Case 3: bf16 logits + bf16 targets (narrow HBM stream, sub=16 tiling).
    N3, C3 = 24, 256
    logits3 = (jax.random.normal(k5, (N3, C3), dtype=jnp.float32) * 2.0
               ).astype(jnp.bfloat16)
    targets3 = (jax.random.uniform(k6, (N3, C3)) > 0.5).astype(jnp.bfloat16)
    loss3 = jax.block_until_ready(focal_loss([logits3], targets3)[0][0])
    ref3 = _focal_loss_ref([logits3], targets3)
    assert jnp.allclose(loss3, ref3, rtol=1e-4, atol=1e-5), (loss3, ref3)

    # Case 4: soft (non-binary) targets -> exact exp(-bce) fallback path.
    N4, C4 = 8, 128
    logits4 = jax.random.normal(k7, (N4, C4), dtype=jnp.float32) * 2.0
    targets4 = jax.random.uniform(k8, (N4, C4), dtype=jnp.float32)
    loss4 = jax.block_until_ready(
        focal_loss([logits4], targets4, binary_targets=False)[0][0])
    ref4 = _focal_loss_ref([logits4], targets4)
    assert jnp.allclose(loss4, ref4, rtol=1e-4, atol=1e-5), (loss4, ref4)

    print("KERNEL_OK")
</pallas_src>

<mosaic_0001>
module attributes {stable_mosaic.version = 11 : i64} {
  func.func @_focal_loss_kernel(%arg0: i32, %arg1: i32, %arg2: memref<16x128xf32, #tpu.memory_space<vmem>>, %arg3: memref<16x128xf32, #tpu.memory_space<vmem>>, %arg4: memref<1x1xf32, #tpu.memory_space<smem>>, %arg5: memref<8x128xf32, #tpu.memory_space<vmem>>) attributes {dimension_semantics = [#tpu.dimension_semantics<parallel>, #tpu.dimension_semantics<arbitrary>], iteration_bounds = array<i64: 1, 1>, scalar_prefetch = 0 : i64, scratch_operands = 1 : i64, tpu.core_type = #tpu.core_type<tc>, window_params = [{transform_indices = @transform_0, window_bounds = array<i64: 16, 128>}, {transform_indices = @transform_1, window_bounds = array<i64: 16, 128>}, {transform_indices = @transform_2, window_bounds = array<i64: 1, 1>}]} {
    %c0_i32 = arith.constant 0 : i32
    %0 = arith.cmpi eq, %arg1, %c0_i32 : i32
    %1 = arith.extui %0 : i1 to i32
    %c0_i32_0 = arith.constant 0 : i32
    %2 = arith.cmpi ne, %1, %c0_i32_0 : i32
    scf.if %2 {
      %cst_17 = arith.constant 0.000000e+00 : f32
      %37 = vector.broadcast %cst_17 : f32 to vector<8x128xf32>
      %c0_18 = arith.constant 0 : index
      %c0_19 = arith.constant 0 : index
      %38 = vector.load %arg5[%c0_18, %c0_19] : memref<8x128xf32, #tpu.memory_space<vmem>>, vector<8x128xf32>
      tpu.vector_store %arg5[%c0_18, %c0_19], %37 {strides = array<i32>} : memref<8x128xf32, #tpu.memory_space<vmem>>, vector<8x128xf32>,
    } else {
    }
    %c0 = arith.constant 0 : index
    %c0_1 = arith.constant 0 : index
    %3 = vector.load %arg2[%c0, %c0_1] : memref<16x128xf32, #tpu.memory_space<vmem>>, vector<16x128xf32>
    %c0_2 = arith.constant 0 : index
    %c0_3 = arith.constant 0 : index
    %4 = vector.load %arg3[%c0_2, %c0_3] : memref<16x128xf32, #tpu.memory_space<vmem>>, vector<16x128xf32>
    %5 = math.absf %3 : vector<16x128xf32>
    %cst = arith.constant 0.000000e+00 : f32
    %6 = vector.broadcast %cst : f32 to vector<16x128xf32>
    %7 = arith.subf %6, %5 : vector<16x128xf32>
    %8 = math.exp %7 : vector<16x128xf32>
    %cst_4 = arith.constant 0.000000e+00 : f32
    %9 = vector.broadcast %cst_4 : f32 to vector<16x128xf32>
    %10 = arith.maximumf %3, %9 : vector<16x128xf32>
    %11 = arith.mulf %3, %4 : vector<16x128xf32>
    %12 = arith.subf %10, %11 : vector<16x128xf32>
    %13 = math.log1p %8 : vector<16x128xf32>
    %14 = arith.addf %12, %13 : vector<16x128xf32>
    %cst_5 = arith.constant 0.000000e+00 : f32
    %15 = vector.broadcast %cst_5 : f32 to vector<16x128xf32>
    %16 = arith.cmpf oge, %3, %15 : vector<16x128xf32>
    %cst_6 = arith.constant 5.000000e-01 : f32
    %17 = vector.broadcast %cst_6 : f32 to vector<16x128xf32>
    %18 = arith.cmpf ogt, %4, %17 : vector<16x128xf32>
    %19 = arith.xori %16, %18 : vector<16x128xi1>
    %cst_7 = arith.constant 1.000000e+00 : f32
    %20 = vector.broadcast %cst_7 : f32 to vector<16x128xf32>
    %21 = arith.select %19, %8, %20 : vector<16x128xi1>, vector<16x128xf32>
    %cst_8 = arith.constant 1.000000e+00 : f32
    %22 = vector.broadcast %cst_8 : f32 to vector<16x128xf32>
    %23 = arith.addf %22, %8 : vector<16x128xf32>
    %24 = arith.divf %21, %23 : vector<16x128xf32>
    %cst_9 = arith.constant 1.000000e+00 : f32
    %25 = vector.broadcast %cst_9 : f32 to vector<16x128xf32>
    %26 = arith.subf %25, %24 : vector<16x128xf32>
    %27 = arith.mulf %26, %26 : vector<16x128xf32>
    %28 = arith.mulf %14, %27 : vector<16x128xf32>
    %c0_10 = arith.constant 0 : index
    %c0_11 = arith.constant 0 : index
    %29 = vector.load %arg5[%c0_10, %c0_11] : memref<8x128xf32, #tpu.memory_space<vmem>>, vector<8x128xf32>
    %30 = vector.shape_cast %28 : vector<16x128xf32> to vector<2x8x128xf32>
    %cst_12 = arith.constant dense<0.000000e+00> : vector<8x128xf32>
    %31 = vector.multi_reduction <add>, %30, %cst_12 [0] : vector<2x8x128xf32> to vector<8x128xf32>
    %32 = arith.addf %29, %31 : vector<8x128xf32>
    %c0_13 = arith.constant 0 : index
    %c0_14 = arith.constant 0 : index
    %33 = vector.load %arg5[%c0_13, %c0_14] : memref<8x128xf32, #tpu.memory_space<vmem>>, vector<8x128xf32>
    tpu.vector_store %arg5[%c0_13, %c0_14], %32 {strides = array<i32>} : memref<8x128xf32, #tpu.memory_space<vmem>>, vector<8x128xf32>,
    %c0_i32_15 = arith.constant 0 : i32
    %34 = arith.cmpi eq, %arg1, %c0_i32_15 : i32
    %35 = arith.extui %34 : i1 to i32
    %c0_i32_16 = arith.constant 0 : i32
    %36 = arith.cmpi ne, %35, %c0_i32_16 : i32
    scf.if %36 {
      %c0_17 = arith.constant 0 : index
      %c0_18 = arith.constant 0 : index
      %37 = vector.load %arg5[%c0_17, %c0_18] : memref<8x128xf32, #tpu.memory_space<vmem>>, vector<8x128xf32>
      %38 = vector.shape_cast %37 : vector<8x128xf32> to vector<1x8x128xf32>
      %cst_19 = arith.constant dense<0.000000e+00> : vector<1xf32>
      %39 = vector.multi_reduction <add>, %38, %cst_19 [1, 2] : vector<1x8x128xf32> to vector<1xf32>
      %40 = vector.shape_cast %39 : vector<1xf32> to vector<1x1x1xf32>
      %41 = vector.extract %40[0, 0, 0] : f32 from vector<1x1x1xf32>
      %c0_20 = arith.constant 0 : index
      %c0_21 = arith.constant 0 : index
      %42 = memref.load %arg4[%c0_20, %c0_21] : memref<1x1xf32, #tpu.memory_space<smem>>
      memref.store %41, %arg4[%c0_20, %c0_21] : memref<1x1xf32, #tpu.memory_space<smem>>
    } else {
    }
    return
  }
  func.func @transform_0(%arg0: i32, %arg1: i32) -> (i32, i32) {
    %c1_i32 = arith.constant 1 : i32
    %0 = arith.muli %arg0, %c1_i32 : i32
    %1 = arith.addi %0, %arg1 : i32
    %c0_i32 = arith.constant 0 : i32
    %c0_i32_0 = arith.constant 0 : i32
    return %1, %c0_i32 : i32, i32
  }
  func.func @transform_1(%arg0: i32, %arg1: i32) -> (i32, i32) {
    %c1_i32 = arith.constant 1 : i32
    %0 = arith.muli %arg0, %c1_i32 : i32
    %1 = arith.addi %0, %arg1 : i32
    %c0_i32 = arith.constant 0 : i32
    %c0_i32_0 = arith.constant 0 : i32
    return %1, %c0_i32 : i32, i32
  }
  func.func @transform_2(%arg0: i32, %arg1: i32) -> (i32, i32) {
    %c0_i32 = arith.constant 0 : i32
    %c0_i32_0 = arith.constant 0 : i32
    return %arg0, %c0_i32 : i32, i32
  }
}

</mosaic_0001>

<llo_original>
// kernel: tpu_custom_call.1
$region0: #{tpu_custom_call.1}
  #allocation0 [shape = 'u32[]', space=smem, size = 0x4, offset = 0x4, fixed_abs, tag = 'smem constant byte address 0x4 - core index']
  #allocation1 [shape = 'u32[144,128]{1,0:T(1,128)}', space=vmem, size = 0x12000, scoped, tag = 'internal scratch']
  #allocation2 [shape = 'f32[8,128]{1,0:T(8,128)}', space=vmem, size = 0x1000, scoped, tag = 'scratch operand']
  %s0 = inlined_call_operand.hbm [shape: f32[16,128], index: 0, kind: input, shape index: {}]
  %s1 = inlined_call_operand.hbm [shape: f32[16,128], index: 1, kind: input, shape index: {}]
  %s2 = inlined_call_operand.hbm [shape: f32[1,1], index: 2, kind: output, shape index: {}]
  %s3 = sld [smem:[#allocation0]]
  $region34: #{tpu_custom_call.1} parent=0
    _
  %s5 = ssub.s32 1, %s3
  %s6 = scalar_select 0, %s5, %s3
  $region1: #{tpu_custom_call.1} parent=0
    #allocation3 [shape = 'u8[8192]{0}', space=vmem, size = 0x2000, scoped, tag = 'input window, operand 0, single buffered']
    #allocation4 [shape = 's32[1]{0}', space=sflag, size = 0x4, scoped, tag = 'scoped memory for tpu_custom_call.1']
    #allocation5 [shape = 's32[1]{0}', space=sflag, size = 0x4, scoped, tag = 'scoped memory for tpu_custom_call.1']
    #allocation6 [shape = 'u8[8192]{0}', space=vmem, size = 0x2000, scoped, tag = 'input window, operand 1, single buffered']
    #allocation7 [shape = 's32[1]{0}', space=sflag, size = 0x4, scoped, tag = 'scoped memory for tpu_custom_call.1']
    #allocation8 [shape = 'u8[512]{0}', space=smem, size = 0x200, scoped, tag = 'output window, operand 0, single buffered']
    %7 = vsyncpa [#allocation4], 0
    %8 = vsyncpa [#allocation7], 0
    %9 = vsyncpa [#allocation5], 0
    // Predicated region
    $region2: #{tpu_custom_call.1} parent=1 // pred_check
      _
    $region3: #{tpu_custom_call.1} parent=1 // pred_check_branch
      %11 = sbr.rel (0) target = $region5
    $region4: #{tpu_custom_call.1} parent=1 // pred_region
      %s12 = sadd.s32 0, 0
      %s13 = smul.u32 2, %s12
      %s15 = ssub.s32 256, 256
      %16 = vsyncadd [#allocation4], %s15
      %s17 = smul.addr %s13, 128
      %s18 = scalar_lea.hbm %s0, %s17
      %s19 = sshll.u32 [#allocation3], 4
      %s20 = int_to_ptr.vmem [resolvable:$true] %s19
      %25 = dma.hbm_to_vmem [thread:$0]  %s18, 256, %s20, [#allocation4], 128, 128, 8
    $region5: #{tpu_custom_call.1} parent=1 // pred_fallthru
      _
    // Predicated region
    $region6: #{tpu_custom_call.1} parent=1 // pred_check
      _
    $region7: #{tpu_custom_call.1} parent=1 // pred_check_branch
      %27 = sbr.rel (0) target = $region9
    $region8: #{tpu_custom_call.1} parent=1 // pred_region
      %s28 = sadd.s32 0, 0
      %s29 = smul.u32 2, %s28
      %s31 = ssub.s32 256, 256
      %32 = vsyncadd [#allocation7], %s31
      %s33 = smul.addr %s29, 128
      %s34 = scalar_lea.hbm %s1, %s33
      %s35 = sshll.u32 [#allocation6], 4
      %s36 = int_to_ptr.vmem [resolvable:$true] %s35
      %41 = dma.hbm_to_vmem [thread:$0]  %s34, 256, %s36, [#allocation7], 128, 128, 8
    $region9: #{tpu_custom_call.1} parent=1 // pred_fallthru
      _
    // Predicated region
    $region10: #{tpu_custom_call.1} parent=1 // pred_check
      _
    $region11: #{tpu_custom_call.1} parent=1 // pred_check_branch
      %43 = sbr.rel (0) target = $region13
    $region12: #{tpu_custom_call.1} parent=1 // pred_region
      %44 = dma.done [#allocation4], 256
    $region13: #{tpu_custom_call.1} parent=1 // pred_fallthru
      _
    // Predicated region
    $region14: #{tpu_custom_call.1} parent=1 // pred_check
      _
    $region15: #{tpu_custom_call.1} parent=1 // pred_check_branch
      %46 = sbr.rel (0) target = $region17
    $region16: #{tpu_custom_call.1} parent=1 // pred_region
      %47 = dma.done [#allocation7], 256
    $region17: #{tpu_custom_call.1} parent=1 // pred_fallthru
      _
    %s48 = sadd.s32 0, 0
    %s49 = smul.u32 2, %s48
    %s50 = sadd.s32 0, 0
    %s51 = smul.u32 2, %s50
    %p52 = scmp.eq.s32.totalorder 0, 0
    // Predicated region
    $region18: #{tpu_custom_call.1} parent=1 // pred_check
      %p53 = pneg %p52
    $region19: #{tpu_custom_call.1} parent=1 // pred_check_branch
      %55 = sbr.rel (%p53) target = $region21
    $region20: #{tpu_custom_call.1} parent=1 // pred_region
      %56 = vst [vmem:[#allocation2] sm:$0xff] 0.0
    $region21: #{tpu_custom_call.1} parent=1 // pred_fallthru
      _
    %v57 = vld [vmem:[#allocation3] sm:$0xff]
    %v58 = vld [vmem:[#allocation3 + $0x8] sm:$0xff]
    %v59 = vld [vmem:[#allocation6] sm:$0xff]
    %v60 = vld [vmem:[#allocation6 + $0x8] sm:$0xff]
    %v61 = vand.u32 2147483647, %v57
    %v62 = vand.u32 2147483647, %v58
    %v63 = vsub.f32 0.0, %v61
    %v64 = vsub.f32 0.0, %v62
    %v65 = vmul.f32 %v63, 1.442695
    %v66 = vpow.pop %v65
    %v67 = vmul.f32 %v64, 1.442695
    %v68 = vpow.pop %v67
    %v69 = vmax.f32 %v57, 0.0
    %v70 = vmax.f32 %v58, 0.0
    %v71 = vmul.f32 %v57, %v59
    %v72 = vmul.f32 %v58, %v60
    %v73 = vsub.f32 %v69, %v71
    %v74 = vsub.f32 %v70, %v72
    %v75 = vadd.f32 %v66, 1.0
    %v76 = vlog2.pop %v75
    %v77 = vmul.f32 %v76, 0.6931472
    %v78 = vmul.f32 -0.5, %v66
    %v79 = vadd.f32 %v78, 1.0
    %v80 = vmul.f32 %v79, %v66
    %v81 = vand.u32 2147483647, %v66
    %vm82 = vcmp.lt.f32.partialorder %v81, 0.0004427343
    %v83 = vsel %vm82, %v80, %v77
    %v84 = vadd.f32 %v68, 1.0
    %v85 = vlog2.pop %v84
    %v86 = vmul.f32 %v85, 0.6931472
    %v87 = vmul.f32 -0.5, %v68
    %v88 = vadd.f32 %v87, 1.0
    %v89 = vmul.f32 %v88, %v68
    %v90 = vand.u32 2147483647, %v68
    %vm91 = vcmp.lt.f32.partialorder %v90, 0.0004427343
    %v92 = vsel %vm91, %v89, %v86
    %v93 = vadd.f32 %v73, %v83
    %v94 = vadd.f32 %v74, %v92
    %vm95 = vcmp.ge.f32.partialorder %v57, 0.0
    %vm96 = vcmp.ge.f32.partialorder %v58, 0.0
    %vm97 = vcmp.gt.f32.partialorder %v59, 0.5
    %vm98 = vcmp.gt.f32.partialorder %v60, 0.5
    %vm99 = vmxor %vm95, %vm97
    %vm100 = vmxor %vm96, %vm98
    %v101 = vsel %vm99, %v66, 1.0
    %v102 = vsel %vm100, %v68, 1.0
    %v103 = vadd.f32 %v66, 1.0
    %v104 = vadd.f32 %v68, 1.0
    %v105 = vrcp.pop %v103
    %v106 = vmul.f32 %v101, %v105
    %v107 = vrcp.pop %v104
    %v108 = vmul.f32 %v102, %v107
    %v109 = vsub.f32 1.0, %v106
    %v110 = vsub.f32 1.0, %v108
    %v111 = vmul.f32 %v109, %v109
    %v112 = vmul.f32 %v110, %v110
    %v113 = vmul.f32 %v93, %v111
    %v114 = vmul.f32 %v94, %v112
    %v115 = vld [vmem:[#allocation2] sm:$0xff]
    %v116 = vadd.f32 %v113, %v114
    %v117 = vadd.f32 %v115, %v116
    %118 = vst [vmem:[#allocation2] sm:$0xff] %v117
    // Predicated region
    $region22: #{tpu_custom_call.1} parent=1 // pred_check
      %p119 = pneg %p52
    $region23: #{tpu_custom_call.1} parent=1 // pred_check_branch
      %121 = sbr.rel (%p119) target = $region25
    $region24: #{tpu_custom_call.1} parent=1 // pred_region
      %v122 = vld [vmem:[#allocation2] sm:$0xff]
      %123 = vadd.xlane.f32.xlu0 %v122
      %v124 = vpop.xlane.xlu0 %123
      %v125 = vrot.slane %v124, 4
      %v126 = vadd.f32 %v124, %v125
      %v127 = vrot.slane %v126, 2
      %v128 = vadd.f32 %v126, %v127
      %v129 = vrot.slane %v128, 1
      %v130 = vadd.f32 %v128, %v129
      %s131 = vtos %v130
      %s132 = scalar_lea.smem [#allocation8], 0
      %133 = sst [smem:[%s132]] %s131
    $region25: #{tpu_custom_call.1} parent=1 // pred_fallthru
      _
    // Predicated region
    $region26: #{tpu_custom_call.1} parent=1 // pred_check
      _
    $region27: #{tpu_custom_call.1} parent=1 // pred_check_branch
      %135 = sbr.rel (0) target = $region29
    $region28: #{tpu_custom_call.1} parent=1 // pred_region
      %s137 = ssub.s32 16, 16
      %138 = vsyncadd [#allocation5], %s137
      %141 = dma.smem_to_hbm [#allocation8], 16, %s2, [#allocation5]
    $region29: #{tpu_custom_call.1} parent=1 // pred_fallthru
      _
    // Predicated region
    $region30: #{tpu_custom_call.1} parent=1 // pred_check
      _
    $region31: #{tpu_custom_call.1} parent=1 // pred_check_branch
      %143 = sbr.rel (0) target = $region33
    $region32: #{tpu_custom_call.1} parent=1 // pred_region
      %144 = dma.done [#allocation5], 16
    $region33: #{tpu_custom_call.1} parent=1 // pred_fallthru
      _
    %145 = sfence
    %146 = vsyncpa [#allocation4], 1
    %147 = vsyncpa [#allocation7], 1
    %148 = vsyncpa [#allocation5], 1

</llo_original>
